<compile_context>
chip_gen: v7x
topology: tpu7x:2x2x1
jax: 0.10.0
libtpu: 0.0.40
codegen_flags: <defaults>
</compile_context>

<pallas_src>
import functools

import jax
import jax.numpy as jnp
from jax import lax
from jax.experimental import pallas as pl
from jax.experimental.pallas import tpu as pltpu

_V_PAD = 16  # extra all-ones V channels -> softmax row-sum is produced by the MXU


# --------------------------------------------------------------------------------------
# Pass 1: per-(batch, channel) spatial sum / sum-of-squares for GroupNorm statistics.
# x is read once in its native (B, C, HW) layout; the tiny group combine + fused
# scale/bias (a, b with xn = x*a + b) is done in plain JAX in the wrapper (O(B*C) work).
# --------------------------------------------------------------------------------------
def gn_sums_kernel(x_ref, s1_ref, s2_ref):
    si = pl.program_id(1)

    @pl.when(si == 0)
    def _init():
        s1_ref[0] = jnp.zeros(s1_ref.shape[1:], s1_ref.dtype)
        s2_ref[0] = jnp.zeros(s2_ref.shape[1:], s2_ref.dtype)

    xb = x_ref[0]                                            # (C, ts) f32
    # Lane (spatial) reductions; this pass is HBM-bound so the XLU has slack.
    # NOTE: single-pass E[x^2]-E[x]^2 in f32; guarded against cancellation below.
    s1_ref[0] += jnp.sum(xb, axis=1, keepdims=True)
    s2_ref[0] += jnp.sum(xb * xb, axis=1, keepdims=True)


# --------------------------------------------------------------------------------------
# Pass 2: fused Q/K/V projection.  One wide matmul W_qkv (3C, C) @ xn (C, tp).
#   Q is written transposed as (B, HW, C) bf16 (softmax scale pre-folded into Wq/bq).
#   K is written as (B, C, HW) bf16.
#   V is written as (B, C+16, HW) bf16 with the padding channels set to 1.0 so the
#   attention pass gets the softmax denominator from the p@V matmul for free.
# --------------------------------------------------------------------------------------
def qkv_proj_kernel(a_ref, b_ref, x_ref, w_ref, bias_ref, q_ref, k_ref, v_ref, *, C):
    # GroupNorm apply is a single f32 FMA; cast only at the MXU boundary.
    xn = (x_ref[0] * a_ref[0] + b_ref[0]).astype(jnp.bfloat16)           # (C, tp)
    qkv = jnp.dot(w_ref[...], xn, preferred_element_type=jnp.float32) + bias_ref[...]
    q_ref[0] = jnp.transpose(qkv[:C, :]).astype(jnp.bfloat16)            # (tp, C)
    k_ref[0] = qkv[C:2 * C, :].astype(jnp.bfloat16)                      # (C, tp)
    v_ref[0, :C, :] = qkv[2 * C:, :].astype(jnp.bfloat16)
    v_ref[0, C:, :] = jnp.ones((v_ref.shape[1] - C, v_ref.shape[2]), jnp.bfloat16)


# --------------------------------------------------------------------------------------
# Pass 3: flash attention (online softmax) + output projection + residual, all in the
# NCHW layout.  The q block is revisited across the K/V axis (no re-DMA); K/V are either
# streamed in tiles or grid-resident (tk = HW).  The running softmax denominator lives
# in the last columns of the accumulator (ones channels of V).
# --------------------------------------------------------------------------------------
def flash_attn_kernel(q_ref, k_ref, v_ref, x_ref, wp_ref, bp_ref, o_ref,
                      m_scr, acc_scr, *, C):
    ki = pl.program_id(2)
    nk = pl.num_programs(2)

    @pl.when(ki == 0)
    def _init():
        m_scr[...] = jnp.full_like(m_scr, -jnp.inf)
        acc_scr[...] = jnp.zeros_like(acc_scr)

    # s[i, j] = sum_c q[i, c] * k[c, j]   (softmax scale already folded into q)
    s = jnp.dot(q_ref[0], k_ref[0], preferred_element_type=jnp.float32)   # (tq, tk) f32

    m_prev = m_scr[...]
    m_new = jnp.maximum(m_prev, jnp.max(s, axis=-1, keepdims=True))
    alpha = jnp.exp(m_prev - m_new)
    p = jnp.exp(s - m_new).astype(jnp.bfloat16)
    # (tq, C + _V_PAD): columns [C:] are the running row-sums (V padding channels are 1).
    acc_scr[...] = alpha * acc_scr[...] + lax.dot_general(
        p, v_ref[0], (((1,), (1,)), ((), ())), preferred_element_type=jnp.float32)
    m_scr[...] = m_new

    @pl.when(ki == nk - 1)
    def _finalize():
        acc = acc_scr[...]
        l = acc[:, C:C + 1]                                   # softmax denominator
        out_t = (acc[:, :C] / l).astype(jnp.bfloat16)         # exact reciprocal, once/q-tile
        # h[o, i] = sum_c Wp[o, c] * out_t[i, c]  ->  (C, tq): no output transpose needed.
        h = lax.dot_general(wp_ref[...], out_t, (((1,), (1,)), ((), ())),
                            preferred_element_type=jnp.float32)
        o_ref[0] = x_ref[0] + h + bp_ref[...]                 # residual + bias in f32


# --------------------------------------------------------------------------------------
# Wrapper
# --------------------------------------------------------------------------------------
def _pick_tile(n, max_tile):
    """Largest divisor of n that is <= max_tile and a multiple of 16 (bf16 sublane
    friendly), else a multiple of 8, else n itself (full extent is always legal)."""
    max_tile = max(1, min(max_tile, n))
    for align in (16, 8):
        for t in range(max_tile, align - 1, -1):
            if n % t == 0 and t % align == 0:
                return t
    return n


def _vmem_capacity_bytes():
    try:
        cap = int(getattr(pltpu.get_tpu_info(), "vmem_capacity_bytes", 0))
        if cap > 0:
            return cap
    except Exception:
        pass
    return 64 * 1024 * 1024        # conservative (v7x per-TensorCore VMEM)


def _vmem_limit(estimate, cap):
    # actual usage + ~50% headroom, floored at 16 MiB, never above ~90% of physical VMEM
    return int(min(max(int(estimate * 1.5) + (1 << 20), 16 << 20), int(cap * 0.9)))


def attn_block_pallas(x_nchw, params, *, num_groups, eps=1e-6,
                      tq=None, tk=None, ts=None, tp=None):
    B, C, H, W = x_nchw.shape
    HW = H * W
    G = num_groups
    assert C % G == 0, "channels must be divisible by num_groups"
    gsize = C // G
    CE = C + _V_PAD
    scale = C ** (-0.5)
    f32, bf16 = jnp.float32, jnp.bfloat16

    cap = _vmem_capacity_bytes()
    budget = int(cap * 0.55)

    # ---- tile selection -------------------------------------------------------------
    ts_v = _pick_tile(HW, ts if ts is not None else 2048)     # pass 1 (mem-bound)
    tp_v = _pick_tile(HW, tp if tp is not None else 512)      # pass 2 (mem-bound)

    def p3_bytes(tq_, tk_):
        return int(2 * tq_ * C * 2                 # q tiles (bf16, double-buffered)
                   + 2 * (C + CE) * tk_ * 2        # k + v tiles (bf16, double-buffered)
                   + 4 * C * tq_ * 4               # x in + out tiles (f32, double-buffered)
                   + C * C * 2 + C * 4             # Wp, bp
                   + tq_ * CE * 4 + tq_ * 4        # acc + running-max scratch
                   + tq_ * tk_ * 10                # s (f32), p (bf16), exp temporaries
                   + C * tq_ * 4)                  # h temporary

    # q tile: >=512 by default; keep >=2 parallel grid cells so v7x's 2 TCs stay busy.
    if tq is None:
        tq_v = _pick_tile(HW, 512)
        if B * (HW // tq_v) < 2:
            tq_v = _pick_tile(HW, max(HW // 2, 1))
    else:
        tq_v = _pick_tile(HW, tq)

    if tk is None:
        if p3_bytes(tq_v, HW) <= budget:
            tk_v = HW                              # K/V grid-resident: DMA'd once per batch
        else:
            if tq is None:                         # streaming: a bigger q tile halves K/V traffic
                for cand in (1024, 512):
                    t = _pick_tile(HW, cand)
                    if B * (HW // t) >= 2 and p3_bytes(t, _pick_tile(HW, 512)) <= budget:
                        tq_v = t
                        break
            tk_v = _pick_tile(HW, 128)
            for cand in (1024, 512, 256):
                t = _pick_tile(HW, cand)
                if p3_bytes(tq_v, t) <= budget:
                    tk_v = t
                    break
    else:
        tk_v = _pick_tile(HW, tk)

    # ---- layout: NCHW -> (B, C, HW) is a pure reshape (no HBM transpose) -------------
    x = x_nchw.reshape(B, C, HW).astype(f32)

    # ---- pass 1: GroupNorm spatial sums ----------------------------------------------
    p1_est = 3 * C * ts_v * 4 + 8 * C * 4
    s1, s2 = pl.pallas_call(
        gn_sums_kernel,
        out_shape=(jax.ShapeDtypeStruct((B, C, 1), f32),
                   jax.ShapeDtypeStruct((B, C, 1), f32)),
        grid_spec=pltpu.PrefetchScalarGridSpec(
            num_scalar_prefetch=0,
            grid=(B, HW // ts_v),
            in_specs=[pl.BlockSpec((1, C, ts_v), lambda b, s: (b, 0, s))],
            out_specs=(pl.BlockSpec((1, C, 1), lambda b, s: (b, 0, 0)),
                       pl.BlockSpec((1, C, 1), lambda b, s: (b, 0, 0)))),
        compiler_params=pltpu.CompilerParams(
            dimension_semantics=("parallel", "arbitrary"),
            vmem_limit_bytes=_vmem_limit(p1_est, cap)),
    )(x)

    # Tiny group combine + fused scale/bias in plain JAX (O(B*C) work, KBs of traffic).
    n_per_group = float(HW * gsize)
    gamma = params["gamma"].reshape(C).astype(f32)
    beta = params["beta"].reshape(C).astype(f32)
    gs1 = s1.reshape(B, G, gsize).sum(axis=2)
    gs2 = s2.reshape(B, G, gsize).sum(axis=2)
    mean_g = gs1 / n_per_group
    var_g = jnp.maximum(gs2 / n_per_group - mean_g * mean_g, 0.0)   # cancellation guard
    inv_g = lax.rsqrt(var_g + eps)
    mean_c = jnp.repeat(mean_g, gsize, axis=1)                      # (B, C)
    inv_c = jnp.repeat(inv_g, gsize, axis=1)                        # (B, C)
    a_vec = inv_c * gamma[None, :]
    b_vec = beta[None, :] - mean_c * a_vec
    a_bc = a_vec.reshape(B, C, 1).astype(f32)
    b_bc = b_vec.reshape(B, C, 1).astype(f32)

    # ---- 1x1 convs as matmuls; bf16 MXU weights, f32 biases. Scale folded into Wq/bq. -
    w_all = jnp.concatenate(
        [params["wq"].astype(f32) * scale, params["wk"].astype(f32),
         params["wv"].astype(f32)], axis=0).astype(bf16)                  # (3C, C)
    b_all = jnp.concatenate(
        [params["bq"].astype(f32) * scale, params["bk"].astype(f32),
         params["bv"].astype(f32)], axis=0).reshape(3 * C, 1).astype(f32)  # (3C, 1)
    wp = params["wp"].astype(bf16)                                         # (C, C)
    bp = params["bp"].reshape(C, 1).astype(f32)

    # ---- pass 2: fused Q/K/V projection ----------------------------------------------
    p2_est = (2 * C * tp_v * 4 + 3 * C * C * 2 + 3 * C * 4
              + 2 * (tp_v * C + C * tp_v + CE * tp_v) * 2
              + C * tp_v * 6 + 3 * C * tp_v * 4 + tp_v * C * 6 + 8 * C * 4)
    q_all, k_all, v_all = pl.pallas_call(
        functools.partial(qkv_proj_kernel, C=C),
        out_shape=(jax.ShapeDtypeStruct((B, HW, C), bf16),
                   jax.ShapeDtypeStruct((B, C, HW), bf16),
                   jax.ShapeDtypeStruct((B, CE, HW), bf16)),
        grid_spec=pltpu.PrefetchScalarGridSpec(
            num_scalar_prefetch=0,
            grid=(B, HW // tp_v),
            in_specs=[
                pl.BlockSpec((1, C, 1), lambda b, i: (b, 0, 0)),      # a (GN scale)
                pl.BlockSpec((1, C, 1), lambda b, i: (b, 0, 0)),      # b (GN bias)
                pl.BlockSpec((1, C, tp_v), lambda b, i: (b, 0, i)),   # x tile (NCHW)
                pl.BlockSpec((3 * C, C), lambda b, i: (0, 0)),        # [scale*Wq; Wk; Wv]
                pl.BlockSpec((3 * C, 1), lambda b, i: (0, 0)),        # fused biases
            ],
            out_specs=(pl.BlockSpec((1, tp_v, C), lambda b, i: (b, i, 0)),
                       pl.BlockSpec((1, C, tp_v), lambda b, i: (b, 0, i)),
                       pl.BlockSpec((1, CE, tp_v), lambda b, i: (b, 0, i)))),
        compiler_params=pltpu.CompilerParams(
            dimension_semantics=("parallel", "parallel"),
            vmem_limit_bytes=_vmem_limit(p2_est, cap)),
    )(a_bc, b_bc, x, w_all, b_all)

    # ---- pass 3: flash attention + output projection + residual -----------------------
    out = pl.pallas_call(
        functools.partial(flash_attn_kernel, C=C),
        out_shape=jax.ShapeDtypeStruct((B, C, HW), f32),
        grid_spec=pltpu.PrefetchScalarGridSpec(
            num_scalar_prefetch=0,
            grid=(B, HW // tq_v, HW // tk_v),
            in_specs=[
                pl.BlockSpec((1, tq_v, C), lambda b, q, k: (b, q, 0)),   # Q tile (bf16)
                pl.BlockSpec((1, C, tk_v), lambda b, q, k: (b, 0, k)),   # K tile (bf16)
                pl.BlockSpec((1, CE, tk_v), lambda b, q, k: (b, 0, k)),  # V+ones tile (bf16)
                pl.BlockSpec((1, C, tq_v), lambda b, q, k: (b, 0, q)),   # x tile (residual)
                pl.BlockSpec((C, C), lambda b, q, k: (0, 0)),            # Wp
                pl.BlockSpec((C, 1), lambda b, q, k: (0, 0)),            # bp
            ],
            out_specs=pl.BlockSpec((1, C, tq_v), lambda b, q, k: (b, 0, q)),
            scratch_shapes=[
                pltpu.VMEM((tq_v, 1), f32),     # running max
                pltpu.VMEM((tq_v, CE), f32),    # output accumulator (+ row-sum columns)
            ]),
        compiler_params=pltpu.CompilerParams(
            dimension_semantics=("parallel", "parallel", "arbitrary"),
            vmem_limit_bytes=_vmem_limit(p3_bytes(tq_v, tk_v), cap)),
    )(q_all, k_all, v_all, x, wp, bp)

    return out.reshape(B, C, H, W)     # pure reshape, no transpose


# --------------------------------------------------------------------------------------
# Pure-JAX reference matching the PyTorch forward (NCHW, f32 throughout)
# --------------------------------------------------------------------------------------
def attn_block_ref(x, params, *, num_groups, eps=1e-6):
    B, C, H, W = x.shape
    G = num_groups
    scale = C ** (-0.5)
    xg = x.reshape(B, G, C // G, H, W)
    mean = jnp.mean(xg, axis=(2, 3, 4), keepdims=True)
    var = jnp.mean((xg - mean) ** 2, axis=(2, 3, 4), keepdims=True)
    xn = ((xg - mean) / jnp.sqrt(var + eps)).reshape(B, C, H, W)
    xn = xn * params["gamma"][None, :, None, None] + params["beta"][None, :, None, None]

    def conv1x1(t, w, b):
        return jnp.einsum("oc,bchw->bohw", w, t) + b[None, :, None, None]

    q = conv1x1(xn, params["wq"], params["bq"]).reshape(B, C, H * W)
    k = conv1x1(xn, params["wk"], params["bk"]).reshape(B, C, H * W)
    v = conv1x1(xn, params["wv"], params["bv"]).reshape(B, C, H * W)
    attn = jnp.einsum("bci,bcj->bij", q, k) * scale
    attn = jax.nn.softmax(attn, axis=2)
    out = jnp.einsum("bij,bcj->bci", attn, v).reshape(B, C, H, W)
    out = conv1x1(out, params["wp"], params["bp"])
    return x + out


if __name__ == "__main__":
    B, C, H, W = 2, 128, 16, 16        # small, but lane/sublane aligned (C multiple of 128)
    num_groups = 32

    key = jax.random.PRNGKey(0)
    ks = jax.random.split(key, 11)
    params = {
        "gamma": 1.0 + 0.05 * jax.random.normal(ks[0], (C,), jnp.float32),
        "beta": 0.05 * jax.random.normal(ks[1], (C,), jnp.float32),
        "wq": 0.1 * jax.random.normal(ks[2], (C, C), jnp.float32),
        "bq": 0.05 * jax.random.normal(ks[3], (C,), jnp.float32),
        "wk": 0.1 * jax.random.normal(ks[4], (C, C), jnp.float32),
        "bk": 0.05 * jax.random.normal(ks[5], (C,), jnp.float32),
        "wv": 0.1 * jax.random.normal(ks[6], (C, C), jnp.float32),
        "bv": 0.05 * jax.random.normal(ks[7], (C,), jnp.float32),
        "wp": 0.1 * jax.random.normal(ks[8], (C, C), jnp.float32),
        "bp": 0.05 * jax.random.normal(ks[9], (C,), jnp.float32),
    }
    x = jax.random.normal(ks[10], (B, C, H, W), jnp.float32)

    ref = attn_block_ref(x, params, num_groups=num_groups)

    # Default config: auto-tiling picks resident K/V (single k-step) at this size.
    out_a = jax.block_until_ready(attn_block_pallas(x, params, num_groups=num_groups))
    # Forced small tiles: exercises the streaming multi-step online-softmax path and the
    # multi-tile GroupNorm / projection grids.
    out_b = jax.block_until_ready(
        attn_block_pallas(x, params, num_groups=num_groups, tq=128, tk=128, ts=128, tp=128))

    for out in (out_a, out_b):
        assert out.shape == (B, C, H, W)
        max_err = float(jnp.max(jnp.abs(out - ref)))
        # bf16 MXU operands vs. f32 reference -> tolerance loosened accordingly.
        assert jnp.allclose(out, ref, rtol=2e-2, atol=2e-2), \
            f"mismatch vs JAX reference (max abs err {max_err:.4g})"
    print("KERNEL_OK")
</pallas_src>

<mosaic_0001>
module attributes {stable_mosaic.version = 11 : i64} {
  func.func @gn_sums_kernel(%arg0: i32, %arg1: i32, %arg2: memref<1x128x256xf32, #tpu.memory_space<vmem>>, %arg3: memref<1x128x1xf32, #tpu.memory_space<vmem>>, %arg4: memref<1x128x1xf32, #tpu.memory_space<vmem>>) attributes {dimension_semantics = [#tpu.dimension_semantics<parallel>, #tpu.dimension_semantics<arbitrary>], iteration_bounds = array<i64: 2, 1>, scalar_prefetch = 0 : i64, scratch_operands = 0 : i64, tpu.core_type = #tpu.core_type<tc>, window_params = [{transform_indices = @transform_0, window_bounds = array<i64: 1, 128, 256>}, {transform_indices = @transform_1, window_bounds = array<i64: 1, 128, 1>}, {transform_indices = @transform_2, window_bounds = array<i64: 1, 128, 1>}]} {
    %c0_i32 = arith.constant 0 : i32
    %0 = arith.cmpi eq, %arg1, %c0_i32 : i32
    %1 = arith.extui %0 : i1 to i32
    %c0_i32_0 = arith.constant 0 : i32
    %2 = arith.cmpi ne, %1, %c0_i32_0 : i32
    scf.if %2 {
      %cst_16 = arith.constant 0.000000e+00 : f32
      %22 = vector.broadcast %cst_16 : f32 to vector<128x1xf32>
      %c0_17 = arith.constant 0 : index
      %c0_18 = arith.constant 0 : index
      %c0_19 = arith.constant 0 : index
      %23 = vector.load %arg3[%c0_17, %c0_18, %c0_19] : memref<1x128x1xf32, #tpu.memory_space<vmem>>, vector<1x128x1xf32>
      %24 = vector.shape_cast %23 : vector<1x128x1xf32> to vector<128x1xf32>
      %25 = vector.shape_cast %22 : vector<128x1xf32> to vector<1x128x1xf32>
      tpu.vector_store %arg3[%c0_17, %c0_18, %c0_19], %25 {strides = array<i32>} : memref<1x128x1xf32, #tpu.memory_space<vmem>>, vector<1x128x1xf32>,
      %cst_20 = arith.constant 0.000000e+00 : f32
      %26 = vector.broadcast %cst_20 : f32 to vector<128x1xf32>
      %c0_21 = arith.constant 0 : index
      %c0_22 = arith.constant 0 : index
      %c0_23 = arith.constant 0 : index
      %27 = vector.load %arg4[%c0_21, %c0_22, %c0_23] : memref<1x128x1xf32, #tpu.memory_space<vmem>>, vector<1x128x1xf32>
      %28 = vector.shape_cast %27 : vector<1x128x1xf32> to vector<128x1xf32>
      %29 = vector.shape_cast %26 : vector<128x1xf32> to vector<1x128x1xf32>
      tpu.vector_store %arg4[%c0_21, %c0_22, %c0_23], %29 {strides = array<i32>} : memref<1x128x1xf32, #tpu.memory_space<vmem>>, vector<1x128x1xf32>,
    } else {
    }
    %c0 = arith.constant 0 : index
    %c0_1 = arith.constant 0 : index
    %c0_2 = arith.constant 0 : index
    %3 = vector.load %arg2[%c0, %c0_1, %c0_2] : memref<1x128x256xf32, #tpu.memory_space<vmem>>, vector<1x128x256xf32>
    %4 = vector.shape_cast %3 : vector<1x128x256xf32> to vector<128x256xf32>
    %c0_3 = arith.constant 0 : index
    %c0_4 = arith.constant 0 : index
    %c0_5 = arith.constant 0 : index
    %5 = vector.load %arg3[%c0_3, %c0_4, %c0_5] : memref<1x128x1xf32, #tpu.memory_space<vmem>>, vector<1x128x1xf32>
    %6 = vector.shape_cast %5 : vector<1x128x1xf32> to vector<128x1xf32>
    %cst = arith.constant dense<0.000000e+00> : vector<128xf32>
    %7 = vector.multi_reduction <add>, %4, %cst [1] : vector<128x256xf32> to vector<128xf32>
    %8 = vector.shape_cast %7 : vector<128xf32> to vector<128x1xf32>
    %9 = arith.addf %6, %8 : vector<128x1xf32>
    %c0_6 = arith.constant 0 : index
    %c0_7 = arith.constant 0 : index
    %c0_8 = arith.constant 0 : index
    %10 = vector.load %arg3[%c0_6, %c0_7, %c0_8] : memref<1x128x1xf32, #tpu.memory_space<vmem>>, vector<1x128x1xf32>
    %11 = vector.shape_cast %10 : vector<1x128x1xf32> to vector<128x1xf32>
    %12 = vector.shape_cast %9 : vector<128x1xf32> to vector<1x128x1xf32>
    tpu.vector_store %arg3[%c0_6, %c0_7, %c0_8], %12 {strides = array<i32>} : memref<1x128x1xf32, #tpu.memory_space<vmem>>, vector<1x128x1xf32>,
    %c0_9 = arith.constant 0 : index
    %c0_10 = arith.constant 0 : index
    %c0_11 = arith.constant 0 : index
    %13 = vector.load %arg4[%c0_9, %c0_10, %c0_11] : memref<1x128x1xf32, #tpu.memory_space<vmem>>, vector<1x128x1xf32>
    %14 = vector.shape_cast %13 : vector<1x128x1xf32> to vector<128x1xf32>
    %15 = arith.mulf %4, %4 : vector<128x256xf32>
    %cst_12 = arith.constant dense<0.000000e+00> : vector<128xf32>
    %16 = vector.multi_reduction <add>, %15, %cst_12 [1] : vector<128x256xf32> to vector<128xf32>
    %17 = vector.shape_cast %16 : vector<128xf32> to vector<128x1xf32>
    %18 = arith.addf %14, %17 : vector<128x1xf32>
    %c0_13 = arith.constant 0 : index
    %c0_14 = arith.constant 0 : index
    %c0_15 = arith.constant 0 : index
    %19 = vector.load %arg4[%c0_13, %c0_14, %c0_15] : memref<1x128x1xf32, #tpu.memory_space<vmem>>, vector<1x128x1xf32>
    %20 = vector.shape_cast %19 : vector<1x128x1xf32> to vector<128x1xf32>
    %21 = vector.shape_cast %18 : vector<128x1xf32> to vector<1x128x1xf32>
    tpu.vector_store %arg4[%c0_13, %c0_14, %c0_15], %21 {strides = array<i32>} : memref<1x128x1xf32, #tpu.memory_space<vmem>>, vector<1x128x1xf32>,
    return
  }
  func.func @transform_0(%arg0: i32, %arg1: i32) -> (i32, i32, i32) {
    %c0_i32 = arith.constant 0 : i32
    %c0_i32_0 = arith.constant 0 : i32
    return %arg0, %c0_i32, %arg1 : i32, i32, i32
  }
  func.func @transform_1(%arg0: i32, %arg1: i32) -> (i32, i32, i32) {
    %c0_i32 = arith.constant 0 : i32
    %c0_i32_0 = arith.constant 0 : i32
    %c0_i32_1 = arith.constant 0 : i32
    return %arg0, %c0_i32, %c0_i32_0 : i32, i32, i32
  }
  func.func @transform_2(%arg0: i32, %arg1: i32) -> (i32, i32, i32) {
    %c0_i32 = arith.constant 0 : i32
    %c0_i32_0 = arith.constant 0 : i32
    %c0_i32_1 = arith.constant 0 : i32
    return %arg0, %c0_i32, %c0_i32_0 : i32, i32, i32
  }
}

</mosaic_0001>

<llo_original>
// kernel: tpu_custom_call.1
$region0: #{tpu_custom_call.1}
  #allocation0 [shape = 'u32[]', space=smem, size = 0x4, offset = 0x4, fixed_abs, tag = 'smem constant byte address 0x4 - core index']
  #allocation1 [shape = 'u32[144,128]{1,0:T(1,128)}', space=vmem, size = 0x12000, scoped, tag = 'internal scratch']
  %s0 = inlined_call_operand.hbm [shape: f32[2,128,256], index: 0, kind: input, shape index: {}]
  %s1 = inlined_call_operand.vmem [shape: f32[2,128,1], index: 1, kind: output, shape index: {0}]
  %s2 = inlined_call_operand.vmem [shape: f32[2,128,1], index: 2, kind: output, shape index: {1}]
  %3 = xla_tuple %s1, %s2
  %s4 = sld [smem:[#allocation0]]
  $region53: #{tpu_custom_call.1} parent=0
    _
  %s6 = ssub.s32 1, %s4
  %s7 = scalar_select 0, %s6, %s4
  $region1: #{tpu_custom_call.1} parent=0
    #allocation2 [shape = 'u8[262144]{0}', space=vmem, size = 0x40000, scoped, tag = 'input window, operand 0']
    #allocation3 [shape = 's32[2]{0}', space=sflag, size = 0x8, scoped, tag = 'scoped memory for tpu_custom_call.1']
    %8 = vsyncpa [#allocation3], 0
    %s9 = scalar_lea.sflag [#allocation3], 1
    %10 = vsyncpa %s9, 0
    loop: start=0, step=1, limit=4
    $region2: #{tpu_custom_call.1} parent=1 // loop_pre_header
      _
    $region3: #{tpu_custom_call.1} parent=1 // loop_header
      %s12 = sphi 0, %s16
      %p13 = scmp.ge.s32.totalorder %s12, 4
      %s19 = sphi 0, %s31
      %s20 = sphi 0, %s27
      %s21 = sphi 0, %s19
      %s22 = sphi 0, %s20
      %s23 = sphi 0, %s21
      %s24 = sphi 0, %s22
      %s36 = sphi 0, %s38
      %s39 = sphi 0, %s36
      %s40 = sphi 0, %s39
      %s56 = sphi 0, %s40
      %s62 = sphi 0, %s64
      %s65 = sphi 0, %s62
      %s66 = sphi 0, %s65
      %s82 = sphi 0, %s66
      %s88 = sphi 0, %s90
      %s91 = sphi 0, %s88
      %s92 = sphi 0, %s91
      %s108 = sphi 0, %s92
    $region4: #{tpu_custom_call.1} parent=1 // loop_header_branch
      %15 = sbr.rel (%p13) target = $region8
    $region5: #{tpu_custom_call.1} parent=1 // loop_body
      %s17 = ssub.s32 %s12, 1
      %s18 = ssub.s32 %s12, 2
      %s25 = sadd.s32 1, %s20
      %p26 = scmp.ge.s32.totalorder %s25, 1
      %s27 = scalar_select %p26, 0, %s25
      %s28 = sadd.s32 1, %s19
      %s29 = scalar_select %p26, %s28, %s19
      %p30 = scmp.ge.s32.totalorder %s29, 2
      %s31 = scalar_select %p30, 0, %s29
      %s32 = ssub.s32 %s19, %s31
      %s33 = ssub.s32 %s20, %s27
      %s34 = sor.u32 %s32, %s33
      %p35 = scmp.eq.s32.totalorder %s34, 0
      %s37 = sadd.s32 %s36, 1
      %s38 = scalar_select %p35, %s36, %s37
      %p41 = pneg %p35
      %p42 = scmp.eq.s32.totalorder %s12, 1
      %p43 = por %p41, %p42
      %p44 = scmp.ne.s32.totalorder %s36, %s39
      %p45 = scmp.eq.s32.totalorder %s12, 0
      %p46 = por %p44, %p45
      %p47 = scmp.ne.s32.totalorder %s36, %s39
      %p48 = scmp.eq.s32.totalorder %s17, 1
      %p49 = por %p47, %p48
      %p50 = scmp.ne.s32.totalorder %s39, %s40
      %p51 = scmp.eq.s32.totalorder %s17, 0
      %p52 = por %p50, %p51
      %p53 = scmp.ne.s32.totalorder %s39, %s40
      %p54 = scmp.eq.s32.totalorder %s18, 1
      %p55 = por %p53, %p54
      %p57 = scmp.ne.s32.totalorder %s40, %s56
      %p58 = scmp.eq.s32.totalorder %s18, 0
      %p59 = por %p57, %p58
      %s60 = ssub.s32 %s19, %s31
      %p61 = scmp.eq.s32.totalorder %s60, 0
      %s63 = sadd.s32 %s62, 1
      %s64 = scalar_select %p61, %s62, %s63
      %p67 = pneg %p61
      %p68 = scmp.eq.s32.totalorder %s12, 1
      %p69 = por %p67, %p68
      %p70 = scmp.ne.s32.totalorder %s62, %s65
      %p71 = scmp.eq.s32.totalorder %s12, 0
      %p72 = por %p70, %p71
      %p73 = scmp.ne.s32.totalorder %s62, %s65
      %p74 = scmp.eq.s32.totalorder %s17, 1
      %p75 = por %p73, %p74
      %p76 = scmp.ne.s32.totalorder %s65, %s66
      %p77 = scmp.eq.s32.totalorder %s17, 0
      %p78 = por %p76, %p77
      %p79 = scmp.ne.s32.totalorder %s65, %s66
      %p80 = scmp.eq.s32.totalorder %s18, 1
      %p81 = por %p79, %p80
      %p83 = scmp.ne.s32.totalorder %s66, %s82
      %p84 = scmp.eq.s32.totalorder %s18, 0
      %p85 = por %p83, %p84
      %s86 = ssub.s32 %s19, %s31
      %p87 = scmp.eq.s32.totalorder %s86, 0
      %s89 = sadd.s32 %s88, 1
      %s90 = scalar_select %p87, %s88, %s89
      %p93 = pneg %p87
      %p94 = scmp.eq.s32.totalorder %s12, 1
      %p95 = por %p93, %p94
      %p96 = scmp.ne.s32.totalorder %s88, %s91
      %p97 = scmp.eq.s32.totalorder %s12, 0
      %p98 = por %p96, %p97
      %p99 = scmp.ne.s32.totalorder %s88, %s91
      %p100 = scmp.eq.s32.totalorder %s17, 1
      %p101 = por %p99, %p100
      %p102 = scmp.ne.s32.totalorder %s91, %s92
      %p103 = scmp.eq.s32.totalorder %s17, 0
      %p104 = por %p102, %p103
      %p105 = scmp.ne.s32.totalorder %s91, %s92
      %p106 = scmp.eq.s32.totalorder %s18, 1
      %p107 = por %p105, %p106
      %p109 = scmp.ne.s32.totalorder %s92, %s108
      %p110 = scmp.eq.s32.totalorder %s18, 0
      %p111 = por %p109, %p110
      %p112 = scmp.le.s32.totalorder 1, %s12
      %p113 = scmp.lt.s32.totalorder %s12, 3
      %p114 = pnand %p112, %p113
      %p115 = pneg %p114
      // Predicated region
      $region9: #{tpu_custom_call.1} parent=5 // pred_check
        _
      $region10: #{tpu_custom_call.1} parent=5 // pred_check_branch
        %117 = sbr.rel (%p114) target = $region12
      $region11: #{tpu_custom_call.1} parent=5 // pred_region
        %s118 = ssub.s32 %s12, 1
      $region12: #{tpu_custom_call.1} parent=5 // pred_fallthru
        _
      %p119 = scmp.lt.s32.totalorder %s12, 2
      // Predicated region
      $region13: #{tpu_custom_call.1} parent=5 // pred_check
        %p120 = pneg %p119
      $region14: #{tpu_custom_call.1} parent=5 // pred_check_branch
        %122 = sbr.rel (%p120) target = $region16
      $region15: #{tpu_custom_call.1} parent=5 // pred_region
        // Predicated region
        $region17: #{tpu_custom_call.1} parent=15 // pred_check
          %p123 = pneg %p46
        $region18: #{tpu_custom_call.1} parent=15 // pred_check_branch
          %125 = sbr.rel (%p123) target = $region20
        $region19: #{tpu_custom_call.1} parent=15 // pred_region
          %s126 = sand.u32 %s36, 1
          %s127 = scalar_lea.sflag [#allocation3], %s126
          %s128 = sand.u32 %s36, 1
          %s129 = smul.addr %s128, 256
          %s130 = scalar_lea.vmem [#allocation2], %s129
          %s131 = smul.u32 2, %s20
          %s133 = ssub.s32 4096, 4096
          %134 = vsyncadd %s127, %s133
          %s135 = smul.addr %s19, 32
          %s136 = sadd.s32 %s131, %s135
          %s137 = smul.addr %s136, 128
          %s138 = scalar_lea.hbm %s0, %s137
          %s139 = sshll.u32 %s130, 4
          %s140 = int_to_ptr.vmem [resolvable:$true] %s139
          %145 = dma.hbm_to_vmem [thread:$0]  %s138, 4096, %s140, %s127, 256, 256, 16
        $region20: #{tpu_custom_call.1} parent=15 // pred_fallthru
          _
      $region16: #{tpu_custom_call.1} parent=5 // pred_fallthru
        _
      %p146 = scmp.le.s32.totalorder 1, %s12
      %p147 = scmp.lt.s32.totalorder %s12, 3
      %p148 = pnand %p146, %p147
      %p149 = pneg %p148
      // Predicated region
      $region21: #{tpu_custom_call.1} parent=5 // pred_check
        _
      $region22: #{tpu_custom_call.1} parent=5 // pred_check_branch
        %151 = sbr.rel (%p148) target = $region24
      $region23: #{tpu_custom_call.1} parent=5 // pred_region
        %s152 = ssub.s32 %s12, 1
        %s153 = sand.u32 %s39, 1
        %s154 = scalar_lea.sflag [#allocation3], %s153
        %s155 = sand.u32 %s39, 1
        %s156 = smul.addr %s155, 256
        %s157 = scalar_lea.vmem [#allocation2], %s156
        // Predicated region
        $region25: #{tpu_custom_call.1} parent=23 // pred_check
          %p158 = pneg %p52
        $region26: #{tpu_custom_call.1} parent=23 // pred_check_branch
          %160 = sbr.rel (%p158) target = $region28
        $region27: #{tpu_custom_call.1} parent=23 // pred_region
          %161 = dma.done %s154, 4096
        $region28: #{tpu_custom_call.1} parent=23 // pred_fallthru
          _
        %s162 = sand.u32 %s39, 1
        %s163 = scalar_lea.sflag [#allocation3], %s162
        %s164 = sand.u32 %s39, 1
        %s165 = smul.addr %s164, 256
        %s166 = scalar_lea.vmem [#allocation2], %s165
        %p167 = pneg %p52
        %p168 = pneg %p49
        %p169 = pneg %p78
        %p170 = pneg %p75
        %p171 = scmp.lt.s32.totalorder %s21, 1
        %s172 = scalar_select %p171, %s21, 1
        %s173 = smul.addr %s172, 16
        %s174 = smul.addr %s173, 8
        %s175 = scalar_lea.vmem %s1, %s174
        %p176 = pneg %p104
        %p177 = pneg %p101
        %p178 = scmp.lt.s32.totalorder %s21, 1
        %s179 = scalar_select %p178, %s21, 1
        %s180 = smul.addr %s179, 16
        %s181 = smul.addr %s180, 8
        %s182 = scalar_lea.vmem %s2, %s181
        %s183 = smul.u32 2, %s22
        %p184 = scmp.lt.s32.totalorder %s21, 1
        %s185 = scalar_select %p184, %s21, 1
        %s186 = smul.addr %s185, 16
        %s187 = smul.addr %s186, 8
        %s188 = scalar_lea.vmem %s1, %s187
        %p189 = scmp.lt.s32.totalorder %s21, 1
        %s190 = scalar_select %p189, %s21, 1
        %s191 = smul.addr %s190, 16
        %s192 = smul.addr %s191, 8
        %s193 = scalar_lea.vmem %s2, %s192
        %p194 = scmp.eq.s32.totalorder %s22, 0
        // Predicated region
        $region29: #{tpu_custom_call.1} parent=23 // pred_check
          %p195 = pneg %p194
        $region30: #{tpu_custom_call.1} parent=23 // pred_check_branch
          %197 = sbr.rel (%p195) target = $region32
        $region31: #{tpu_custom_call.1} parent=23 // pred_region
          %vm198 = vcmask 7168
          %199 = vst.msk [vmem:[%s188] sm:$0xff] %vm198, 0.0
          %200 = vst.msk [vmem:[%s188 + $0x8] sm:$0xff] %vm198, 0.0
          %201 = vst.msk [vmem:[%s188 + $0x10] sm:$0xff] %vm198, 0.0
          %202 = vst.msk [vmem:[%s188 + $0x18] sm:$0xff] %vm198, 0.0
          %203 = vst.msk [vmem:[%s188 + $0x20] sm:$0xff] %vm198, 0.0
          %204 = vst.msk [vmem:[%s188 + $0x28] sm:$0xff] %vm198, 0.0
          %205 = vst.msk [vmem:[%s188 + $0x30] sm:$0xff] %vm198, 0.0
          %206 = vst.msk [vmem:[%s188 + $0x38] sm:$0xff] %vm198, 0.0
          %207 = vst.msk [vmem:[%s188 + $0x40] sm:$0xff] %vm198, 0.0
          %208 = vst.msk [vmem:[%s188 + $0x48] sm:$0xff] %vm198, 0.0
          %209 = vst.msk [vmem:[%s188 + $0x50] sm:$0xff] %vm198, 0.0
          %210 = vst.msk [vmem:[%s188 + $0x58] sm:$0xff] %vm198, 0.0
          %211 = vst.msk [vmem:[%s188 + $0x60] sm:$0xff] %vm198, 0.0
          %212 = vst.msk [vmem:[%s188 + $0x68] sm:$0xff] %vm198, 0.0
          %213 = vst.msk [vmem:[%s188 + $0x70] sm:$0xff] %vm198, 0.0
          %214 = vst.msk [vmem:[%s188 + $0x78] sm:$0xff] %vm198, 0.0
          %215 = vst.msk [vmem:[%s193] sm:$0xff] %vm198, 0.0
          %216 = vst.msk [vmem:[%s193 + $0x8] sm:$0xff] %vm198, 0.0
          %217 = vst.msk [vmem:[%s193 + $0x10] sm:$0xff] %vm198, 0.0
          %218 = vst.msk [vmem:[%s193 + $0x18] sm:$0xff] %vm198, 0.0
          %219 = vst.msk [vmem:[%s193 + $0x20] sm:$0xff] %vm198, 0.0
          %220 = vst.msk [vmem:[%s193 + $0x28] sm:$0xff] %vm198, 0.0
          %221 = vst.msk [vmem:[%s193 + $0x30] sm:$0xff] %vm198, 0.0
          %222 = vst.msk [vmem:[%s193 + $0x38] sm:$0xff] %vm198, 0.0
          %223 = vst.msk [vmem:[%s193 + $0x40] sm:$0xff] %vm198, 0.0
          %224 = vst.msk [vmem:[%s193 + $0x48] sm:$0xff] %vm198, 0.0
          %225 = vst.msk [vmem:[%s193 + $0x50] sm:$0xff] %vm198, 0.0
          %226 = vst.msk [vmem:[%s193 + $0x58] sm:$0xff] %vm198, 0.0
          %227 = vst.msk [vmem:[%s193 + $0x60] sm:$0xff] %vm198, 0.0
          %228 = vst.msk [vmem:[%s193 + $0x68] sm:$0xff] %vm198, 0.0
          %229 = vst.msk [vmem:[%s193 + $0x70] sm:$0xff] %vm198, 0.0
          %230 = vst.msk [vmem:[%s193 + $0x78] sm:$0xff] %vm198, 0.0
        $region32: #{tpu_custom_call.1} parent=23 // pred_fallthru
          _
        %v231 = vld [vmem:[%s157] sm:$0xff]
        %v232 = vld [vmem:[%s157 + $0x8] sm:$0xff]
        %v233 = vld [vmem:[%s157 + $0x10] sm:$0xff]
        %v234 = vld [vmem:[%s157 + $0x18] sm:$0xff]
        %v235 = vld [vmem:[%s157 + $0x20] sm:$0xff]
        %v236 = vld [vmem:[%s157 + $0x28] sm:$0xff]
        %v237 = vld [vmem:[%s157 + $0x30] sm:$0xff]
        %v238 = vld [vmem:[%s157 + $0x38] sm:$0xff]
        %v239 = vld [vmem:[%s157 + $0x40] sm:$0xff]
        %v240 = vld [vmem:[%s157 + $0x48] sm:$0xff]
        %v241 = vld [vmem:[%s157 + $0x50] sm:$0xff]
        %v242 = vld [vmem:[%s157 + $0x58] sm:$0xff]
        %v243 = vld [vmem:[%s157 + $0x60] sm:$0xff]
        %v244 = vld [vmem:[%s157 + $0x68] sm:$0xff]
        %v245 = vld [vmem:[%s157 + $0x70] sm:$0xff]
        %v246 = vld [vmem:[%s157 + $0x78] sm:$0xff]
        %v247 = vld [vmem:[%s157 + $0x80] sm:$0xff]
        %v248 = vld [vmem:[%s157 + $0x88] sm:$0xff]
        %v249 = vld [vmem:[%s157 + $0x90] sm:$0xff]
        %v250 = vld [vmem:[%s157 + $0x98] sm:$0xff]
        %v251 = vld [vmem:[%s157 + $0xa0] sm:$0xff]
        %v252 = vld [vmem:[%s157 + $0xa8] sm:$0xff]
        %v253 = vld [vmem:[%s157 + $0xb0] sm:$0xff]
        %v254 = vld [vmem:[%s157 + $0xb8] sm:$0xff]
        %v255 = vld [vmem:[%s157 + $0xc0] sm:$0xff]
        %v256 = vld [vmem:[%s157 + $0xc8] sm:$0xff]
        %v257 = vld [vmem:[%s157 + $0xd0] sm:$0xff]
        %v258 = vld [vmem:[%s157 + $0xd8] sm:$0xff]
        %v259 = vld [vmem:[%s157 + $0xe0] sm:$0xff]
        %v260 = vld [vmem:[%s157 + $0xe8] sm:$0xff]
        %v261 = vld [vmem:[%s157 + $0xf0] sm:$0xff]
        %v262 = vld [vmem:[%s157 + $0xf8] sm:$0xff]
        %v263 = vld [vmem:[%s188] sm:$0xff]
        %v264 = vld [vmem:[%s188 + $0x8] sm:$0xff]
        %v265 = vld [vmem:[%s188 + $0x10] sm:$0xff]
        %v266 = vld [vmem:[%s188 + $0x18] sm:$0xff]
        %v267 = vld [vmem:[%s188 + $0x20] sm:$0xff]
        %v268 = vld [vmem:[%s188 + $0x28] sm:$0xff]
        %v269 = vld [vmem:[%s188 + $0x30] sm:$0xff]
        %v270 = vld [vmem:[%s188 + $0x38] sm:$0xff]
        %v271 = vld [vmem:[%s188 + $0x40] sm:$0xff]
        %v272 = vld [vmem:[%s188 + $0x48] sm:$0xff]
        %v273 = vld [vmem:[%s188 + $0x50] sm:$0xff]
        %v274 = vld [vmem:[%s188 + $0x58] sm:$0xff]
        %v275 = vld [vmem:[%s188 + $0x60] sm:$0xff]
        %v276 = vld [vmem:[%s188 + $0x68] sm:$0xff]
        %v277 = vld [vmem:[%s188 + $0x70] sm:$0xff]
        %v278 = vld [vmem:[%s188 + $0x78] sm:$0xff]
        %v279 = vadd.f32 %v231, %v232
        %280 = vadd.xlane.f32.xlu0 %v279
        %v281 = vpop.xlane.xlu0 %280
        %v282 = vadd.f32 %v233, %v234
        %283 = vadd.xlane.f32.xlu0 %v282
        %v284 = vpop.xlane.xlu0 %283
        %v285 = vadd.f32 %v235, %v236
        %286 = vadd.xlane.f32.xlu0 %v285
        %v287 = vpop.xlane.xlu0 %286
        %v288 = vadd.f32 %v237, %v238
        %289 = vadd.xlane.f32.xlu0 %v288
        %v290 = vpop.xlane.xlu0 %289
        %v291 = vadd.f32 %v239, %v240
        %292 = vadd.xlane.f32.xlu0 %v291
        %v293 = vpop.xlane.xlu0 %292
        %v294 = vadd.f32 %v241, %v242
        %295 = vadd.xlane.f32.xlu0 %v294
        %v296 = vpop.xlane.xlu0 %295
        %v297 = vadd.f32 %v243, %v244
        %298 = vadd.xlane.f32.xlu0 %v297
        %v299 = vpop.xlane.xlu0 %298
        %v300 = vadd.f32 %v245, %v246
        %301 = vadd.xlane.f32.xlu0 %v300
        %v302 = vpop.xlane.xlu0 %301
        %v303 = vadd.f32 %v247, %v248
        %304 = vadd.xlane.f32.xlu0 %v303
        %v305 = vpop.xlane.xlu0 %304
        %v306 = vadd.f32 %v249, %v250
        %307 = vadd.xlane.f32.xlu0 %v306
        %v308 = vpop.xlane.xlu0 %307
        %v309 = vadd.f32 %v251, %v252
        %310 = vadd.xlane.f32.xlu0 %v309
        %v311 = vpop.xlane.xlu0 %310
        %v312 = vadd.f32 %v253, %v254
        %313 = vadd.xlane.f32.xlu0 %v312
        %v314 = vpop.xlane.xlu0 %313
        %v315 = vadd.f32 %v255, %v256
        %316 = vadd.xlane.f32.xlu0 %v315
        %v317 = vpop.xlane.xlu0 %316
        %v318 = vadd.f32 %v257, %v258
        %319 = vadd.xlane.f32.xlu0 %v318
        %v320 = vpop.xlane.xlu0 %319
        %v321 = vadd.f32 %v259, %v260
        %322 = vadd.xlane.f32.xlu0 %v321
        %v323 = vpop.xlane.xlu0 %322
        %v324 = vadd.f32 %v261, %v262
        %325 = vadd.xlane.f32.xlu0 %v324
        %v326 = vpop.xlane.xlu0 %325
        %v327 = vadd.f32 %v263, %v281
        %v328 = vadd.f32 %v264, %v284
        %v329 = vadd.f32 %v265, %v287
        %v330 = vadd.f32 %v266, %v290
        %v331 = vadd.f32 %v267, %v293
        %v332 = vadd.f32 %v268, %v296
        %v333 = vadd.f32 %v269, %v299
        %v334 = vadd.f32 %v270, %v302
        %v335 = vadd.f32 %v271, %v305
        %v336 = vadd.f32 %v272, %v308
        %v337 = vadd.f32 %v273, %v311
        %v338 = vadd.f32 %v274, %v314
        %v339 = vadd.f32 %v275, %v317
        %v340 = vadd.f32 %v276, %v320
        %v341 = vadd.f32 %v277, %v323
        %v342 = vadd.f32 %v278, %v326
        %vm343 = vcmask 7168
        %344 = vst.msk [vmem:[%s188] sm:$0xff] %vm343, %v327
        %345 = vst.msk [vmem:[%s188 + $0x8] sm:$0xff] %vm343, %v328
        %346 = vst.msk [vmem:[%s188 + $0x10] sm:$0xff] %vm343, %v329
        %347 = vst.msk [vmem:[%s188 + $0x18] sm:$0xff] %vm343, %v330
        %348 = vst.msk [vmem:[%s188 + $0x20] sm:$0xff] %vm343, %v331
        %349 = vst.msk [vmem:[%s188 + $0x28] sm:$0xff] %vm343, %v332
        %350 = vst.msk [vmem:[%s188 + $0x30] sm:$0xff] %vm343, %v333
        %351 = vst.msk [vmem:[%s188 + $0x38] sm:$0xff] %vm343, %v334
        %352 = vst.msk [vmem:[%s188 + $0x40] sm:$0xff] %vm343, %v335
        %353 = vst.msk [vmem:[%s188 + $0x48] sm:$0xff] %vm343, %v336
        %354 = vst.msk [vmem:[%s188 + $0x50] sm:$0xff] %vm343, %v337
        %355 = vst.msk [vmem:[%s188 + $0x58] sm:$0xff] %vm343, %v338
        %356 = vst.msk [vmem:[%s188 + $0x60] sm:$0xff] %vm343, %v339
        %357 = vst.msk [vmem:[%s188 + $0x68] sm:$0xff] %vm343, %v340
        %358 = vst.msk [vmem:[%s188 + $0x70] sm:$0xff] %vm343, %v341
        %359 = vst.msk [vmem:[%s188 + $0x78] sm:$0xff] %vm343, %v342
        %v360 = vld [vmem:[%s193] sm:$0xff]
        %v361 = vld [vmem:[%s193 + $0x8] sm:$0xff]
        %v362 = vld [vmem:[%s193 + $0x10] sm:$0xff]
        %v363 = vld [vmem:[%s193 + $0x18] sm:$0xff]
        %v364 = vld [vmem:[%s193 + $0x20] sm:$0xff]
        %v365 = vld [vmem:[%s193 + $0x28] sm:$0xff]
        %v366 = vld [vmem:[%s193 + $0x30] sm:$0xff]
        %v367 = vld [vmem:[%s193 + $0x38] sm:$0xff]
        %v368 = vld [vmem:[%s193 + $0x40] sm:$0xff]
        %v369 = vld [vmem:[%s193 + $0x48] sm:$0xff]
        %v370 = vld [vmem:[%s193 + $0x50] sm:$0xff]
        %v371 = vld [vmem:[%s193 + $0x58] sm:$0xff]
        %v372 = vld [vmem:[%s193 + $0x60] sm:$0xff]
        %v373 = vld [vmem:[%s193 + $0x68] sm:$0xff]
        %v374 = vld [vmem:[%s193 + $0x70] sm:$0xff]
        %v375 = vld [vmem:[%s193 + $0x78] sm:$0xff]
        %v376 = vmul.f32 %v231, %v231
        %v377 = vmul.f32 %v232, %v232
        %v378 = vmul.f32 %v233, %v233
        %v379 = vmul.f32 %v234, %v234
        %v380 = vmul.f32 %v235, %v235
        %v381 = vmul.f32 %v236, %v236
        %v382 = vmul.f32 %v237, %v237
        %v383 = vmul.f32 %v238, %v238
        %v384 = vmul.f32 %v239, %v239
        %v385 = vmul.f32 %v240, %v240
        %v386 = vmul.f32 %v241, %v241
        %v387 = vmul.f32 %v242, %v242
        %v388 = vmul.f32 %v243, %v243
        %v389 = vmul.f32 %v244, %v244
        %v390 = vmul.f32 %v245, %v245
        %v391 = vmul.f32 %v246, %v246
        %v392 = vmul.f32 %v247, %v247
        %v393 = vmul.f32 %v248, %v248
        %v394 = vmul.f32 %v249, %v249
        %v395 = vmul.f32 %v250, %v250
        %v396 = vmul.f32 %v251, %v251
        %v397 = vmul.f32 %v252, %v252
        %v398 = vmul.f32 %v253, %v253
        %v399 = vmul.f32 %v254, %v254
        %v400 = vmul.f32 %v255, %v255
        %v401 = vmul.f32 %v256, %v256
        %v402 = vmul.f32 %v257, %v257
        %v403 = vmul.f32 %v258, %v258
        %v404 = vmul.f32 %v259, %v259
        %v405 = vmul.f32 %v260, %v260
        %v406 = vmul.f32 %v261, %v261
        %v407 = vmul.f32 %v262, %v262
        %v408 = vadd.f32 %v376, %v377
        %409 = vadd.xlane.f32.xlu0 %v408
        %v410 = vpop.xlane.xlu0 %409
        %v411 = vadd.f32 %v378, %v379
        %412 = vadd.xlane.f32.xlu0 %v411
        %v413 = vpop.xlane.xlu0 %412
        %v414 = vadd.f32 %v380, %v381
        %415 = vadd.xlane.f32.xlu0 %v414
        %v416 = vpop.xlane.xlu0 %415
        %v417 = vadd.f32 %v382, %v383
        %418 = vadd.xlane.f32.xlu0 %v417
        %v419 = vpop.xlane.xlu0 %418
        %v420 = vadd.f32 %v384, %v385
        %421 = vadd.xlane.f32.xlu0 %v420
        %v422 = vpop.xlane.xlu0 %421
        %v423 = vadd.f32 %v386, %v387
        %424 = vadd.xlane.f32.xlu0 %v423
        %v425 = vpop.xlane.xlu0 %424
        %v426 = vadd.f32 %v388, %v389
        %427 = vadd.xlane.f32.xlu0 %v426
        %v428 = vpop.xlane.xlu0 %427
        %v429 = vadd.f32 %v390, %v391
        %430 = vadd.xlane.f32.xlu0 %v429
        %v431 = vpop.xlane.xlu0 %430
        %v432 = vadd.f32 %v392, %v393
        %433 = vadd.xlane.f32.xlu0 %v432
        %v434 = vpop.xlane.xlu0 %433
        %v435 = vadd.f32 %v394, %v395
        %436 = vadd.xlane.f32.xlu0 %v435
        %v437 = vpop.xlane.xlu0 %436
        %v438 = vadd.f32 %v396, %v397
        %439 = vadd.xlane.f32.xlu0 %v438
        %v440 = vpop.xlane.xlu0 %439
        %v441 = vadd.f32 %v398, %v399
        %442 = vadd.xlane.f32.xlu0 %v441
        %v443 = vpop.xlane.xlu0 %442
        %v444 = vadd.f32 %v400, %v401
        %445 = vadd.xlane.f32.xlu0 %v444
        %v446 = vpop.xlane.xlu0 %445
        %v447 = vadd.f32 %v402, %v403
        %448 = vadd.xlane.f32.xlu0 %v447
        %v449 = vpop.xlane.xlu0 %448
        %v450 = vadd.f32 %v404, %v405
        %451 = vadd.xlane.f32.xlu0 %v450
        %v452 = vpop.xlane.xlu0 %451
        %v453 = vadd.f32 %v406, %v407
        %454 = vadd.xlane.f32.xlu0 %v453
        %v455 = vpop.xlane.xlu0 %454
        %v456 = vadd.f32 %v360, %v410
        %v457 = vadd.f32 %v361, %v413
        %v458 = vadd.f32 %v362, %v416
        %v459 = vadd.f32 %v363, %v419
        %v460 = vadd.f32 %v364, %v422
        %v461 = vadd.f32 %v365, %v425
        %v462 = vadd.f32 %v366, %v428
        %v463 = vadd.f32 %v367, %v431
        %v464 = vadd.f32 %v368, %v434
        %v465 = vadd.f32 %v369, %v437
        %v466 = vadd.f32 %v370, %v440
        %v467 = vadd.f32 %v371, %v443
        %v468 = vadd.f32 %v372, %v446
        %v469 = vadd.f32 %v373, %v449
        %v470 = vadd.f32 %v374, %v452
        %v471 = vadd.f32 %v375, %v455
        %472 = vst.msk [vmem:[%s193] sm:$0xff] %vm343, %v456
        %473 = vst.msk [vmem:[%s193 + $0x8] sm:$0xff] %vm343, %v457
        %474 = vst.msk [vmem:[%s193 + $0x10] sm:$0xff] %vm343, %v458
        %475 = vst.msk [vmem:[%s193 + $0x18] sm:$0xff] %vm343, %v459
        %476 = vst.msk [vmem:[%s193 + $0x20] sm:$0xff] %vm343, %v460
        %477 = vst.msk [vmem:[%s193 + $0x28] sm:$0xff] %vm343, %v461
        %478 = vst.msk [vmem:[%s193 + $0x30] sm:$0xff] %vm343, %v462
        %479 = vst.msk [vmem:[%s193 + $0x38] sm:$0xff] %vm343, %v463
        %480 = vst.msk [vmem:[%s193 + $0x40] sm:$0xff] %vm343, %v464
        %481 = vst.msk [vmem:[%s193 + $0x48] sm:$0xff] %vm343, %v465
        %482 = vst.msk [vmem:[%s193 + $0x50] sm:$0xff] %vm343, %v466
        %483 = vst.msk [vmem:[%s193 + $0x58] sm:$0xff] %vm343, %v467
        %484 = vst.msk [vmem:[%s193 + $0x60] sm:$0xff] %vm343, %v468
        %485 = vst.msk [vmem:[%s193 + $0x68] sm:$0xff] %vm343, %v469
        %486 = vst.msk [vmem:[%s193 + $0x70] sm:$0xff] %vm343, %v470
        %487 = vst.msk [vmem:[%s193 + $0x78] sm:$0xff] %vm343, %v471
        %p488 = scmp.lt.s32.totalorder %s21, 1
        %s489 = scalar_select %p488, %s21, 1
        %s490 = smul.addr %s489, 16
        %s491 = smul.addr %s490, 8
        %s492 = scalar_lea.vmem %s1, %s491
        %p493 = scmp.lt.s32.totalorder %s21, 1
        %s494 = scalar_select %p493, %s21, 1
        %s495 = smul.addr %s494, 16
        %s496 = smul.addr %s495, 8
        %s497 = scalar_lea.vmem %s2, %s496
        // Predicated region
        $region33: #{tpu_custom_call.1} parent=23 // pred_check
          %p498 = pneg %p75
        $region34: #{tpu_custom_call.1} parent=23 // pred_check_branch
          %500 = sbr.rel (%p498) target = $region36
        $region35: #{tpu_custom_call.1} parent=23 // pred_region
          _
        $region36: #{tpu_custom_call.1} parent=23 // pred_fallthru
          _
        // Predicated region
        $region37: #{tpu_custom_call.1} parent=23 // pred_check
          %p501 = pneg %p101
        $region38: #{tpu_custom_call.1} parent=23 // pred_check_branch
          %503 = sbr.rel (%p501) target = $region40
        $region39: #{tpu_custom_call.1} parent=23 // pred_region
          _
        $region40: #{tpu_custom_call.1} parent=23 // pred_fallthru
          _
      $region24: #{tpu_custom_call.1} parent=5 // pred_fallthru
        _
      %p504 = scmp.le.s32.totalorder 2, %s12
      // Predicated region
      $region41: #{tpu_custom_call.1} parent=5 // pred_check
        %p505 = pneg %p504
      $region42: #{tpu_custom_call.1} parent=5 // pred_check_branch
        %507 = sbr.rel (%p505) target = $region44
      $region43: #{tpu_custom_call.1} parent=5 // pred_region
        %s508 = ssub.s32 %s12, 2
        // Predicated region
        $region45: #{tpu_custom_call.1} parent=43 // pred_check
          %p509 = pneg %p81
        $region46: #{tpu_custom_call.1} parent=43 // pred_check_branch
          %511 = sbr.rel (%p509) target = $region48
        $region47: #{tpu_custom_call.1} parent=43 // pred_region
          %p512 = scmp.lt.s32.totalorder %s23, 1
          %s513 = scalar_select %p512, %s23, 1
          %s514 = smul.addr %s513, 16
          %s515 = smul.addr %s514, 8
          %s516 = scalar_lea.vmem %s1, %s515
        $region48: #{tpu_custom_call.1} parent=43 // pred_fallthru
          _
        // Predicated region
        $region49: #{tpu_custom_call.1} parent=43 // pred_check
          %p517 = pneg %p107
        $region50: #{tpu_custom_call.1} parent=43 // pred_check_branch
          %519 = sbr.rel (%p517) target = $region52
        $region51: #{tpu_custom_call.1} parent=43 // pred_region
          %p520 = scmp.lt.s32.totalorder %s23, 1
          %s521 = scalar_select %p520, %s23, 1
          %s522 = smul.addr %s521, 16
          %s523 = smul.addr %s522, 8
          %s524 = scalar_lea.vmem %s2, %s523
        $region52: #{tpu_custom_call.1} parent=43 // pred_fallthru
          _
      $region44: #{tpu_custom_call.1} parent=5 // pred_fallthru
        _
    $region6: #{tpu_custom_call.1} parent=1 // loop_footer
      %s16 = sadd.s32 1, %s12
    $region7: #{tpu_custom_call.1} parent=1 // loop_footer_branch
      %11 = sbr.rel target = $region3
    $region8: #{tpu_custom_call.1} parent=1 // loop_exit
      _
    %525 = vsyncpa [#allocation3], 1
    %s526 = scalar_lea.sflag [#allocation3], 1
    %527 = vsyncpa %s526, 1

</llo_original>
